<compile_context>
chip_gen: v6e
topology: v6e:2x2x1
jax: 0.10.0
libtpu: 0.0.40
codegen_flags: <defaults>
</compile_context>

<pallas_src>
import functools

import jax
import jax.numpy as jnp
from jax.experimental import pallas as pl
from jax.experimental.pallas import tpu as pltpu


def _round_up(x, m):
    return (x + m - 1) // m * m


_NEG_BIG = -1e30   # mask sentinel for non-edges
_M_INIT = -1e9     # running-max init; > sentinel so masked exp underflows to 0

_VMEM_LIMIT_BYTES = 32 * 1024 * 1024     # explicit scoped cap: safe on v5e/v6e/v7x
_RESIDENT_Z_BUDGET = 28 * 1024 * 1024    # headroom under the cap for resident-z path


# ---------------------------------------------------------------------------
# Kernel A: fused projection.  One MXU pass computes  h @ [ W^T | W^T a_src |
# W^T a_dst ] where the two attention columns live in z's padding lanes.
# ---------------------------------------------------------------------------
def _proj_kernel(h_ref, w_ref, z_ref):
    z_ref[...] = jnp.dot(h_ref[...], w_ref[...],
                         preferred_element_type=jnp.float32).astype(z_ref.dtype)


# ---------------------------------------------------------------------------
# Kernel B: masked-softmax aggregation, flash-style online softmax over src.
#   dst on sublanes, src on lanes; z resident in VMEM (or streamed fallback);
#   output block is resident across the src axis and used as the accumulator.
# ---------------------------------------------------------------------------
def _attn_kernel(d_ref, s_ref, adj_ref, z_ref, out_ref, m_ref, l_ref, *,
                 blk_s, z_resident):
    si = pl.program_id(1)

    @pl.when(si == 0)
    def _():
        m_ref[...] = jnp.full_like(m_ref, _M_INIT)
        l_ref[...] = jnp.zeros_like(l_ref)
        out_ref[...] = jnp.zeros_like(out_ref)

    # Edge logits for this (dst block, src block) tile: (bd, 1) + (1, bs).
    s = s_ref[pl.ds(si, 1), :]                       # resident src logits row
    e = d_ref[...] + s
    e = jnp.where(e >= 0, e, 0.01 * e)               # leaky_relu (slope 0.01)
    e = jnp.where(adj_ref[...] != 0, e, jnp.float32(_NEG_BIG))   # int8 compare

    m_prev = m_ref[...]
    m_new = jnp.maximum(m_prev, jnp.max(e, axis=-1, keepdims=True))
    corr = jnp.exp(m_prev - m_new)
    p = jnp.exp(e - m_new)             # masked entries underflow to exactly 0

    l_ref[...] = corr * l_ref[...] + jnp.sum(p, axis=-1, keepdims=True)

    if z_resident:
        start = pl.multiple_of(si * blk_s, blk_s)
        z_blk = z_ref[pl.ds(start, blk_s), :]        # slice of resident z
    else:
        z_blk = z_ref[...]                            # streamed tile
    out_ref[...] = corr * out_ref[...] + jnp.dot(
        p.astype(z_blk.dtype), z_blk, preferred_element_type=jnp.float32)

    m_ref[...] = m_new

    @pl.when(si == pl.num_programs(1) - 1)
    def _():
        l = l_ref[...]
        l_safe = jnp.where(l > 0, l, jnp.float32(1.0))   # padded / isolated dst
        out_ref[...] = out_ref[...] * pl.reciprocal(l_safe, approx=True)


# ---------------------------------------------------------------------------
# Wrapper helpers
# ---------------------------------------------------------------------------
def padded_num_nodes(n, block=512):
    """Padded node count and block size used by gat_forward for n nodes."""
    blk = min(block, _round_up(n, 128))
    return _round_up(n, blk), blk


def prepare_adjacency(adj, n_pad):
    """One-off O(N^2) prep: int8, (dst, src) orientation, zero-padded."""
    n = adj.shape[0]
    a = (adj != 0).astype(jnp.int8).T
    return jnp.zeros((n_pad, n_pad), jnp.int8).at[:n, :n].set(a)


def _resident_vmem_bytes(n_p, dout_p, blk_d, blk_s, z_itemsize):
    z_b = 2 * n_p * dout_p * z_itemsize                   # double-buffered resident z
    adj_b = 2 * blk_d * blk_s                              # int8 tiles
    out_b = 2 * blk_d * dout_p * 4
    d_b = 2 * blk_d * 128 * 4                              # (blk_d, 1) lane-padded
    s_b = 2 * _round_up(n_p // blk_s, 8) * blk_s * 4
    scr_b = 2 * blk_d * 128 * 4                            # m/l scratch (lane-padded)
    return z_b + adj_b + out_b + d_b + s_b + scr_b + (1 << 20)


def gat_forward(h, w_fc, a_attn, adj, *, block=512, compute_dtype=jnp.float32,
                z_resident=None, adj_is_prepared=False):
    """GAT layer forward.

    h: (N, Din); w_fc: (Dout, Din); a_attn: (1, 2*Dout).
    adj: raw (N, N) with adj[i, j] != 0  <=>  edge i -> j, or (if
    adj_is_prepared=True) the output of prepare_adjacency(adj, n_pad).
    Destinations with no incoming edge (incl. padding) return zero rows.
    """
    n, din = h.shape
    dout = w_fc.shape[0]
    f32 = jnp.float32

    n_p, blk = padded_num_nodes(n, block)
    blk_d = blk_s = blk                                   # kernel B dst/src tiles
    blk_a = 1024 if (n_p % 1024 == 0) else blk            # kernel A row tile
    din_p = _round_up(din, 128)
    dout_p = _round_up(dout, 128)

    # Pack the s/d attention columns into z's padding lanes when possible.
    packed = (dout_p - dout) >= 2
    dz = dout_p if packed else dout_p + 128
    sc, dc = (dout, dout + 1) if packed else (dout_p, dout_p + 1)

    # Padded node features.
    h_p = jnp.zeros((n_p, din_p), f32).at[:n, :din].set(h.astype(f32))

    # Fused projection weights:  [ W^T | W^T a_src | W^T a_dst ].
    w_t = w_fc.astype(f32).T                               # (din, dout)
    a_src = a_attn[0, :dout].astype(f32)
    a_dst = a_attn[0, dout:].astype(f32)
    w_ext = jnp.zeros((din_p, dz), f32)
    w_ext = w_ext.at[:din, :dout].set(w_t)
    w_ext = w_ext.at[:din, sc].set(w_t @ a_src)
    w_ext = w_ext.at[:din, dc].set(w_t @ a_dst)

    # Adjacency (hoist the O(N^2) re-layout out of the hot path when reused).
    if adj_is_prepared:
        if adj.shape != (n_p, n_p) or adj.dtype != jnp.int8:
            raise ValueError("prepared adjacency must be int8 of shape "
                             f"({n_p}, {n_p}), got {adj.dtype} {adj.shape}")
        adj_t = adj
    else:
        adj_t = prepare_adjacency(adj, n_p)

    # ---- Kernel A: fused projection --------------------------------------
    z_full = pl.pallas_call(
        _proj_kernel,
        out_shape=jax.ShapeDtypeStruct((n_p, dz), compute_dtype),
        grid_spec=pltpu.PrefetchScalarGridSpec(
            num_scalar_prefetch=0,
            grid=(n_p // blk_a,),
            in_specs=[pl.BlockSpec((blk_a, din_p), lambda i: (i, 0)),
                      pl.BlockSpec((din_p, dz), lambda i: (0, 0))],
            out_specs=pl.BlockSpec((blk_a, dz), lambda i: (i, 0))),
        compiler_params=pltpu.CompilerParams(
            dimension_semantics=("parallel",)),
    )(h_p.astype(compute_dtype), w_ext.astype(compute_dtype))

    # Tiny layout plumbing: src logits as (n_src_blocks, blk_s) resident slab,
    # dst logits as a column; both f32 (bf16-quantized values if compute_dtype
    # is bf16 -- accepted, see tolerance in the self-check).
    s2d = z_full[:, sc].astype(f32).reshape(n_p // blk_s, blk_s)
    d_col = z_full[:, dc].astype(f32).reshape(n_p, 1)
    z_b = z_full if packed else z_full[:, :dout_p]

    # Resident-z decision against a portable VMEM budget (v7x-safe).
    if z_resident is None:
        itemsize = jax.dtypes.canonicalize_dtype(compute_dtype).itemsize
        z_resident = (_resident_vmem_bytes(n_p, dout_p, blk_d, blk_s, itemsize)
                      <= _RESIDENT_Z_BUDGET)

    if z_resident:
        z_spec = pl.BlockSpec((n_p, dout_p), lambda j, i: (0, 0))     # resident
    else:
        z_spec = pl.BlockSpec((blk_s, dout_p), lambda j, i: (i, 0))   # streamed

    # ---- Kernel B: masked softmax + aggregation ---------------------------
    out_p = pl.pallas_call(
        functools.partial(_attn_kernel, blk_s=blk_s, z_resident=z_resident),
        out_shape=jax.ShapeDtypeStruct((n_p, dout_p), f32),
        grid_spec=pltpu.PrefetchScalarGridSpec(
            num_scalar_prefetch=0,
            grid=(n_p // blk_d, n_p // blk_s),             # (dst blocks, src blocks)
            in_specs=[pl.BlockSpec((blk_d, 1), lambda j, i: (j, 0)),        # d (dst)
                      pl.BlockSpec((n_p // blk_s, blk_s), lambda j, i: (0, 0)),  # s
                      pl.BlockSpec((blk_d, blk_s), lambda j, i: (j, i)),    # adj^T
                      z_spec],                                              # z (src)
            out_specs=pl.BlockSpec((blk_d, dout_p), lambda j, i: (j, 0)),
            scratch_shapes=[pltpu.VMEM((blk_d, 1), f32),     # running max m
                            pltpu.VMEM((blk_d, 1), f32)]),   # running sum l
        compiler_params=pltpu.CompilerParams(
            dimension_semantics=("parallel", "arbitrary"),
            vmem_limit_bytes=_VMEM_LIMIT_BYTES),
    )(d_col, s2d, adj_t, z_b)

    return out_p[:n, :dout]


# ---------------------------------------------------------------------------
# Pure-JAX reference (mirrors the PyTorch/DGL forward) for verification.
# ---------------------------------------------------------------------------
def gat_reference(h, w_fc, a_attn, adj):
    out_dim = w_fc.shape[0]
    z = h @ w_fc.T
    s = z @ a_attn[0, :out_dim]
    d = z @ a_attn[0, out_dim:]
    e = s[:, None] + d[None, :]
    e = jnp.where(e >= 0, e, 0.01 * e)
    e = jnp.where(adj > 0, e, -jnp.inf)
    alpha = jax.nn.softmax(e, axis=0)
    alpha = jnp.where(adj > 0, alpha, 0.0)
    return alpha.T @ z


def xavier_normal(key, shape, gain):
    fan_out, fan_in = shape
    std = gain * jnp.sqrt(2.0 / (fan_in + fan_out))
    return std * jax.random.normal(key, shape, dtype=jnp.float32)


def _make_graph(key, n):
    adj = jax.random.bernoulli(key, 0.5, (n, n)).astype(jnp.float32)
    return jnp.maximum(adj, jnp.eye(n, dtype=jnp.float32))   # self-loops


if __name__ == "__main__":
    IN_DIM, OUT_DIM = 16, 32
    gain = jnp.sqrt(2.0)                                     # calculate_gain('relu')

    key = jax.random.PRNGKey(0)
    k_h, k_w, k_a, k_adj, k_h2, k_adj2 = jax.random.split(key, 6)

    # Parameters (xavier_normal_, gain=sqrt(2)), as in reset_parameters().
    w_fc = xavier_normal(k_w, (OUT_DIM, IN_DIM), gain)       # fc.weight
    a_attn = xavier_normal(k_a, (1, 2 * OUT_DIM), gain)      # attn_fc.weight

    # 1) Small graph (single tile), raw adjacency path, f32.
    N = 8
    h = jax.random.normal(k_h, (N, IN_DIM), dtype=jnp.float32)
    adj = _make_graph(k_adj, N)
    out = jax.block_until_ready(gat_forward(h, w_fc, a_attn, adj))
    ref = gat_reference(h, w_fc, a_attn, adj)
    assert jnp.allclose(out, ref, atol=1e-2, rtol=1e-2), "mismatch (small graph)"

    # 2) Larger graph: multi-block online softmax, pre-prepared adjacency.
    N2 = 1100
    h2 = jax.random.normal(k_h2, (N2, IN_DIM), dtype=jnp.float32)
    adj2 = _make_graph(k_adj2, N2)
    n_pad, _ = padded_num_nodes(N2)
    adj2_prep = prepare_adjacency(adj2, n_pad)               # hoisted, reusable
    ref2 = gat_reference(h2, w_fc, a_attn, adj2)

    out2 = jax.block_until_ready(
        gat_forward(h2, w_fc, a_attn, adj2_prep, adj_is_prepared=True))
    assert jnp.allclose(out2, ref2, atol=1e-2, rtol=1e-2), "mismatch (resident z)"

    # 3) Forced streamed-z fallback path (used when resident z would not fit VMEM).
    out2s = jax.block_until_ready(
        gat_forward(h2, w_fc, a_attn, adj2_prep, adj_is_prepared=True,
                    z_resident=False))
    assert jnp.allclose(out2s, ref2, atol=1e-2, rtol=1e-2), "mismatch (streamed z)"

    # 4) bf16 MXU operands (v6e/v7x fast path); looser tolerance per review.
    out2b = jax.block_until_ready(
        gat_forward(h2, w_fc, a_attn, adj2_prep, adj_is_prepared=True,
                    compute_dtype=jnp.bfloat16))
    assert jnp.allclose(out2b, ref2, atol=5e-2, rtol=5e-2), "mismatch (bf16)"

    print("KERNEL_OK")
</pallas_src>

<mosaic_0001>
module attributes {stable_mosaic.version = 11 : i64} {
  func.func @_proj_kernel(%arg0: i32, %arg1: memref<128x128xf32, #tpu.memory_space<vmem>>, %arg2: memref<128x128xf32, #tpu.memory_space<vmem>>, %arg3: memref<128x128xf32, #tpu.memory_space<vmem>>) attributes {dimension_semantics = [#tpu.dimension_semantics<parallel>], iteration_bounds = array<i64: 1>, scalar_prefetch = 0 : i64, scratch_operands = 0 : i64, tpu.core_type = #tpu.core_type<tc>, window_params = [{transform_indices = @transform_0, window_bounds = array<i64: 128, 128>}, {pipeline_mode = #tpu.pipeline_mode<synchronous>, transform_indices = @transform_1, window_bounds = array<i64: 128, 128>}, {transform_indices = @transform_2, window_bounds = array<i64: 128, 128>}]} {
    %c0 = arith.constant 0 : index
    %c0_0 = arith.constant 0 : index
    %0 = vector.load %arg1[%c0, %c0_0] : memref<128x128xf32, #tpu.memory_space<vmem>>, vector<128x128xf32>
    %c0_1 = arith.constant 0 : index
    %c0_2 = arith.constant 0 : index
    %1 = vector.load %arg2[%c0_1, %c0_2] : memref<128x128xf32, #tpu.memory_space<vmem>>, vector<128x128xf32>
    %cst = arith.constant dense<0.000000e+00> : vector<128x128xf32>
    %2 = tpu.matmul %0, %1, %cst {dimension_numbers = #tpu.dot_dimension_numbers<[1], [0], [0], [1], [0, 0, 1, 1], [], []>} : vector<128x128xf32>, vector<128x128xf32>, vector<128x128xf32> -> vector<128x128xf32>
    %c0_3 = arith.constant 0 : index
    %c0_4 = arith.constant 0 : index
    %3 = vector.load %arg3[%c0_3, %c0_4] : memref<128x128xf32, #tpu.memory_space<vmem>>, vector<128x128xf32>
    tpu.vector_store %arg3[%c0_3, %c0_4], %2 {strides = array<i32>} : memref<128x128xf32, #tpu.memory_space<vmem>>, vector<128x128xf32>,
    return
  }
  func.func @transform_0(%arg0: i32) -> (i32, i32) {
    %c0_i32 = arith.constant 0 : i32
    %c0_i32_0 = arith.constant 0 : i32
    return %arg0, %c0_i32 : i32, i32
  }
  func.func @transform_1(%arg0: i32) -> (i32, i32) {
    %c0_i32 = arith.constant 0 : i32
    %c0_i32_0 = arith.constant 0 : i32
    %c0_i32_1 = arith.constant 0 : i32
    return %c0_i32, %c0_i32_0 : i32, i32
  }
  func.func @transform_2(%arg0: i32) -> (i32, i32) {
    %c0_i32 = arith.constant 0 : i32
    %c0_i32_0 = arith.constant 0 : i32
    return %arg0, %c0_i32 : i32, i32
  }
}

</mosaic_0001>

<llo_original>
// kernel: tpu_custom_call.1
$region0: #{tpu_custom_call.1}
  #allocation0 [shape = 'u32[]', space=smem, size = 0x4, offset = 0x4, fixed_abs, tag = 'smem constant byte address 0x4 - core index']
  #allocation1 [shape = 'u32[144,128]{1,0:T(1,128)}', space=vmem, size = 0x12000, scoped, tag = 'internal scratch']
  %s0 = inlined_call_operand.hbm [shape: f32[128,128], index: 0, kind: input, shape index: {}]
  %s1 = inlined_call_operand.hbm [shape: f32[128,128], index: 1, kind: input, shape index: {}]
  %s2 = inlined_call_operand.hbm [shape: f32[128,128], index: 2, kind: output, shape index: {}]
  %s3 = sld [smem:[#allocation0]]
  $region26: #{tpu_custom_call.1} parent=0
    _
  %s5 = ssub.s32 1, %s3
  %s6 = scalar_select 0, %s5, %s3
  $region1: #{tpu_custom_call.1} parent=0
    #allocation2 [shape = 'u8[65536]{0}', space=vmem, size = 0x10000, scoped, tag = 'input window, operand 0, single buffered']
    #allocation3 [shape = 's32[1]{0}', space=sflag, size = 0x4, scoped, tag = 'scoped memory for tpu_custom_call.1']
    #allocation4 [shape = 's32[1]{0}', space=sflag, size = 0x4, scoped, tag = 'scoped memory for tpu_custom_call.1']
    #allocation5 [shape = 'u8[65536]{0}', space=vmem, size = 0x10000, scoped, tag = 'input window, operand 1, single buffered']
    #allocation6 [shape = 's32[1]{0}', space=sflag, size = 0x4, scoped, tag = 'scoped memory for tpu_custom_call.1']
    #allocation7 [shape = 'u8[65536]{0}', space=vmem, size = 0x10000, scoped, tag = 'output window, operand 0, single buffered']
    %7 = vsyncpa [#allocation3], 0
    %8 = vsyncpa [#allocation6], 0
    %9 = vsyncpa [#allocation4], 0
    // Predicated region
    $region2: #{tpu_custom_call.1} parent=1 // pred_check
      _
    $region3: #{tpu_custom_call.1} parent=1 // pred_check_branch
      %11 = sbr.rel (0) target = $region5
    $region4: #{tpu_custom_call.1} parent=1 // pred_region
      %s13 = ssub.s32 2048, 2048
      %14 = vsyncadd [#allocation3], %s13
      %s15 = sshll.u32 [#allocation2], 4
      %s16 = int_to_ptr.vmem [resolvable:$true] %s15
      %21 = dma.hbm_to_vmem [thread:$0]  %s0, 2048, %s16, [#allocation3], 128, 128, 8
    $region5: #{tpu_custom_call.1} parent=1 // pred_fallthru
      _
    // Predicated region
    $region6: #{tpu_custom_call.1} parent=1 // pred_check
      _
    $region7: #{tpu_custom_call.1} parent=1 // pred_check_branch
      %23 = sbr.rel (0) target = $region9
    $region8: #{tpu_custom_call.1} parent=1 // pred_region
      %s25 = ssub.s32 2048, 2048
      %26 = vsyncadd [#allocation6], %s25
      %s27 = sshll.u32 [#allocation5], 4
      %s28 = int_to_ptr.vmem [resolvable:$true] %s27
      %33 = dma.hbm_to_vmem [thread:$0]  %s1, 2048, %s28, [#allocation6], 128, 128, 8
    $region9: #{tpu_custom_call.1} parent=1 // pred_fallthru
      _
    // Predicated region
    $region10: #{tpu_custom_call.1} parent=1 // pred_check
      _
    $region11: #{tpu_custom_call.1} parent=1 // pred_check_branch
      %35 = sbr.rel (0) target = $region13
    $region12: #{tpu_custom_call.1} parent=1 // pred_region
      %36 = dma.done [#allocation3], 2048
    $region13: #{tpu_custom_call.1} parent=1 // pred_fallthru
      _
    // Predicated region
    $region14: #{tpu_custom_call.1} parent=1 // pred_check
      _
    $region15: #{tpu_custom_call.1} parent=1 // pred_check_branch
      %38 = sbr.rel (0) target = $region17
    $region16: #{tpu_custom_call.1} parent=1 // pred_region
      %39 = dma.done [#allocation6], 2048
    $region17: #{tpu_custom_call.1} parent=1 // pred_fallthru
      _
    %v40 = vld [vmem:[#allocation2] sm:$0xff]
    %v41 = vld [vmem:[#allocation2 + $0x8] sm:$0xff]
    %v42 = vld [vmem:[#allocation2 + $0x10] sm:$0xff]
    %v43 = vld [vmem:[#allocation2 + $0x18] sm:$0xff]
    %v44 = vld [vmem:[#allocation2 + $0x20] sm:$0xff]
    %v45 = vld [vmem:[#allocation2 + $0x28] sm:$0xff]
    %v46 = vld [vmem:[#allocation2 + $0x30] sm:$0xff]
    %v47 = vld [vmem:[#allocation2 + $0x38] sm:$0xff]
    %v48 = vld [vmem:[#allocation2 + $0x40] sm:$0xff]
    %v49 = vld [vmem:[#allocation2 + $0x48] sm:$0xff]
    %v50 = vld [vmem:[#allocation2 + $0x50] sm:$0xff]
    %v51 = vld [vmem:[#allocation2 + $0x58] sm:$0xff]
    %v52 = vld [vmem:[#allocation2 + $0x60] sm:$0xff]
    %v53 = vld [vmem:[#allocation2 + $0x68] sm:$0xff]
    %v54 = vld [vmem:[#allocation2 + $0x70] sm:$0xff]
    %v55 = vld [vmem:[#allocation2 + $0x78] sm:$0xff]
    %v56 = vld [vmem:[#allocation5] sm:$0xff]
    %v57 = vld [vmem:[#allocation5 + $0x8] sm:$0xff]
    %v58 = vld [vmem:[#allocation5 + $0x10] sm:$0xff]
    %v59 = vld [vmem:[#allocation5 + $0x18] sm:$0xff]
    %v60 = vld [vmem:[#allocation5 + $0x20] sm:$0xff]
    %v61 = vld [vmem:[#allocation5 + $0x28] sm:$0xff]
    %v62 = vld [vmem:[#allocation5 + $0x30] sm:$0xff]
    %v63 = vld [vmem:[#allocation5 + $0x38] sm:$0xff]
    %v64 = vld [vmem:[#allocation5 + $0x40] sm:$0xff]
    %v65 = vld [vmem:[#allocation5 + $0x48] sm:$0xff]
    %v66 = vld [vmem:[#allocation5 + $0x50] sm:$0xff]
    %v67 = vld [vmem:[#allocation5 + $0x58] sm:$0xff]
    %v68 = vld [vmem:[#allocation5 + $0x60] sm:$0xff]
    %v69 = vld [vmem:[#allocation5 + $0x68] sm:$0xff]
    %v70 = vld [vmem:[#allocation5 + $0x70] sm:$0xff]
    %v71 = vld [vmem:[#allocation5 + $0x78] sm:$0xff]
    %72 = vmatprep.subr.mxu0 0.0
    %73 = vmatpush1.msra.mxu0 %v71
    %74 = vmatprep.subr.mxu0 0.0
    %75 = vmatpush1.msra.mxu0 %v70
    %76 = vmatprep.subr.mxu0 0.0
    %77 = vmatpush1.msra.mxu0 %v69
    %78 = vmatprep.subr.mxu0 0.0
    %79 = vmatpush1.msra.mxu0 %v68
    %80 = vmatprep.subr.mxu0 0.0
    %81 = vmatpush1.msra.mxu0 %v67
    %82 = vmatprep.subr.mxu0 0.0
    %83 = vmatpush1.msra.mxu0 %v66
    %84 = vmatprep.subr.mxu0 0.0
    %85 = vmatpush1.msra.mxu0 %v65
    %86 = vmatprep.subr.mxu0 0.0
    %87 = vmatpush1.msra.mxu0 %v64
    %88 = vmatprep.subr.mxu0 0.0
    %89 = vmatpush1.msra.mxu0 %v63
    %90 = vmatprep.subr.mxu0 0.0
    %91 = vmatpush1.msra.mxu0 %v62
    %92 = vmatprep.subr.mxu0 0.0
    %93 = vmatpush1.msra.mxu0 %v61
    %94 = vmatprep.subr.mxu0 0.0
    %95 = vmatpush1.msra.mxu0 %v60
    %96 = vmatprep.subr.mxu0 0.0
    %97 = vmatpush1.msra.mxu0 %v59
    %98 = vmatprep.subr.mxu0 0.0
    %99 = vmatpush1.msra.mxu0 %v58
    %100 = vmatprep.subr.mxu0 0.0
    %101 = vmatpush1.msra.mxu0 %v57
    %102 = vmatprep.subr.mxu0 0.0
    %103 = vmatpush1.msra.mxu0 %v56
    %104 = vmatprep.subr.mxu0 0.0
    %105 = vmatpush2.msra.mxu0 0.0
    %106 = vmatprep.subr.mxu0 0.0
    %107 = vmatpush2.msra.mxu0 0.0
    %108 = vmatprep.subr.mxu0 0.0
    %109 = vmatpush2.msra.mxu0 0.0
    %110 = vmatprep.subr.mxu0 0.0
    %111 = vmatpush2.msra.mxu0 0.0
    %112 = vmatprep.subr.mxu0 0.0
    %113 = vmatpush2.msra.mxu0 0.0
    %114 = vmatprep.subr.mxu0 0.0
    %115 = vmatpush2.msra.mxu0 0.0
    %116 = vmatprep.subr.mxu0 0.0
    %117 = vmatpush2.msra.mxu0 0.0
    %118 = vmatprep.subr.mxu0 0.0
    %119 = vmatpush2.msra.mxu0 0.0
    %120 = vmatprep.subr.mxu0 0.0
    %121 = vmatpush2.msra.mxu0 0.0
    %122 = vmatprep.subr.mxu0 0.0
    %123 = vmatpush2.msra.mxu0 0.0
    %124 = vmatprep.subr.mxu0 0.0
    %125 = vmatpush2.msra.mxu0 0.0
    %126 = vmatprep.subr.mxu0 0.0
    %127 = vmatpush2.msra.mxu0 0.0
    %128 = vmatprep.subr.mxu0 0.0
    %129 = vmatpush2.msra.mxu0 0.0
    %130 = vmatprep.subr.mxu0 0.0
    %131 = vmatpush2.msra.mxu0 0.0
    %132 = vmatprep.subr.mxu0 0.0
    %133 = vmatpush2.msra.mxu0 0.0
    %134 = vmatprep.subr.mxu0 0.0
    %135 = vmatpush2.msra.mxu0 0.0
    %136 = vmatprep.mubr.f32.mxu0 0.0
    %137 = vmatmul.mubr.f32.gmra.mxu0 %v40
    %v138 = vpop.f32.mrf.mxu0
    %v139 = vadd.f32 0.0, %v138
    %v140 = vpop.f32.mrf.mxu0
    %141 = vmatprep.mubr.f32.mxu0 0.0
    %142 = vmatmul.mubr.f32.gmra.mxu0 %v41
    %v143 = vpop.f32.mrf.mxu0
    %v144 = vadd.f32 0.0, %v143
    %v145 = vpop.f32.mrf.mxu0
    %146 = vmatprep.mubr.f32.mxu0 0.0
    %147 = vmatmul.mubr.f32.gmra.mxu0 %v42
    %v148 = vpop.f32.mrf.mxu0
    %v149 = vadd.f32 0.0, %v148
    %v150 = vpop.f32.mrf.mxu0
    %151 = vmatprep.mubr.f32.mxu0 0.0
    %152 = vmatmul.mubr.f32.gmra.mxu0 %v43
    %v153 = vpop.f32.mrf.mxu0
    %v154 = vadd.f32 0.0, %v153
    %v155 = vpop.f32.mrf.mxu0
    %156 = vmatprep.mubr.f32.mxu0 0.0
    %157 = vmatmul.mubr.f32.gmra.mxu0 %v44
    %v158 = vpop.f32.mrf.mxu0
    %v159 = vadd.f32 0.0, %v158
    %v160 = vpop.f32.mrf.mxu0
    %161 = vmatprep.mubr.f32.mxu0 0.0
    %162 = vmatmul.mubr.f32.gmra.mxu0 %v45
    %v163 = vpop.f32.mrf.mxu0
    %v164 = vadd.f32 0.0, %v163
    %v165 = vpop.f32.mrf.mxu0
    %166 = vmatprep.mubr.f32.mxu0 0.0
    %167 = vmatmul.mubr.f32.gmra.mxu0 %v46
    %v168 = vpop.f32.mrf.mxu0
    %v169 = vadd.f32 0.0, %v168
    %v170 = vpop.f32.mrf.mxu0
    %171 = vmatprep.mubr.f32.mxu0 0.0
    %172 = vmatmul.mubr.f32.gmra.mxu0 %v47
    %v173 = vpop.f32.mrf.mxu0
    %v174 = vadd.f32 0.0, %v173
    %v175 = vpop.f32.mrf.mxu0
    %176 = vmatprep.mubr.f32.mxu0 0.0
    %177 = vmatmul.mubr.f32.gmra.mxu0 %v48
    %v178 = vpop.f32.mrf.mxu0
    %v179 = vadd.f32 0.0, %v178
    %v180 = vpop.f32.mrf.mxu0
    %181 = vmatprep.mubr.f32.mxu0 0.0
    %182 = vmatmul.mubr.f32.gmra.mxu0 %v49
    %v183 = vpop.f32.mrf.mxu0
    %v184 = vadd.f32 0.0, %v183
    %v185 = vpop.f32.mrf.mxu0
    %186 = vmatprep.mubr.f32.mxu0 0.0
    %187 = vmatmul.mubr.f32.gmra.mxu0 %v50
    %v188 = vpop.f32.mrf.mxu0
    %v189 = vadd.f32 0.0, %v188
    %v190 = vpop.f32.mrf.mxu0
    %191 = vmatprep.mubr.f32.mxu0 0.0
    %192 = vmatmul.mubr.f32.gmra.mxu0 %v51
    %v193 = vpop.f32.mrf.mxu0
    %v194 = vadd.f32 0.0, %v193
    %v195 = vpop.f32.mrf.mxu0
    %196 = vmatprep.mubr.f32.mxu0 0.0
    %197 = vmatmul.mubr.f32.gmra.mxu0 %v52
    %v198 = vpop.f32.mrf.mxu0
    %v199 = vadd.f32 0.0, %v198
    %v200 = vpop.f32.mrf.mxu0
    %201 = vmatprep.mubr.f32.mxu0 0.0
    %202 = vmatmul.mubr.f32.gmra.mxu0 %v53
    %v203 = vpop.f32.mrf.mxu0
    %v204 = vadd.f32 0.0, %v203
    %v205 = vpop.f32.mrf.mxu0
    %206 = vmatprep.mubr.f32.mxu0 0.0
    %207 = vmatmul.mubr.f32.gmra.mxu0 %v54
    %v208 = vpop.f32.mrf.mxu0
    %v209 = vadd.f32 0.0, %v208
    %v210 = vpop.f32.mrf.mxu0
    %211 = vmatprep.mubr.f32.mxu0 0.0
    %212 = vmatmul.mubr.f32.gmra.mxu0 %v55
    %v213 = vpop.f32.mrf.mxu0
    %v214 = vadd.f32 0.0, %v213
    %v215 = vpop.f32.mrf.mxu0
    %216 = vdwg.mxu0
    %217 = vst [vmem:[#allocation7] sm:$0xff] %v139
    %218 = vst [vmem:[#allocation7 + $0x8] sm:$0xff] %v144
    %219 = vst [vmem:[#allocation7 + $0x10] sm:$0xff] %v149
    %220 = vst [vmem:[#allocation7 + $0x18] sm:$0xff] %v154
    %221 = vst [vmem:[#allocation7 + $0x20] sm:$0xff] %v159
    %222 = vst [vmem:[#allocation7 + $0x28] sm:$0xff] %v164
    %223 = vst [vmem:[#allocation7 + $0x30] sm:$0xff] %v169
    %224 = vst [vmem:[#allocation7 + $0x38] sm:$0xff] %v174
    %225 = vst [vmem:[#allocation7 + $0x40] sm:$0xff] %v179
    %226 = vst [vmem:[#allocation7 + $0x48] sm:$0xff] %v184
    %227 = vst [vmem:[#allocation7 + $0x50] sm:$0xff] %v189
    %228 = vst [vmem:[#allocation7 + $0x58] sm:$0xff] %v194
    %229 = vst [vmem:[#allocation7 + $0x60] sm:$0xff] %v199
    %230 = vst [vmem:[#allocation7 + $0x68] sm:$0xff] %v204
    %231 = vst [vmem:[#allocation7 + $0x70] sm:$0xff] %v209
    %232 = vst [vmem:[#allocation7 + $0x78] sm:$0xff] %v214
    // Predicated region
    $region18: #{tpu_custom_call.1} parent=1 // pred_check
      _
    $region19: #{tpu_custom_call.1} parent=1 // pred_check_branch
      %234 = sbr.rel (0) target = $region21
    $region20: #{tpu_custom_call.1} parent=1 // pred_region
      %s236 = ssub.s32 2048, 2048
      %237 = vsyncadd [#allocation4], %s236
      %s238 = sshll.u32 [#allocation7], 4
      %s239 = int_to_ptr.vmem [resolvable:$true] %s238
      %244 = dma.vmem_to_hbm [thread:$0]  %s239, 2048, %s2, [#allocation4], 128, 128, 8
    $region21: #{tpu_custom_call.1} parent=1 // pred_fallthru
      _
    // Predicated region
    $region22: #{tpu_custom_call.1} parent=1 // pred_check
      _
    $region23: #{tpu_custom_call.1} parent=1 // pred_check_branch
      %246 = sbr.rel (0) target = $region25
    $region24: #{tpu_custom_call.1} parent=1 // pred_region
      %247 = dma.done [#allocation4], 2048
    $region25: #{tpu_custom_call.1} parent=1 // pred_fallthru
      _
    %248 = vsyncpa [#allocation3], 1
    %249 = vsyncpa [#allocation6], 1
    %250 = vsyncpa [#allocation4], 1

</llo_original>
